<compile_context>
chip_gen: v7x
topology: tpu7x:2x2x1
jax: 0.10.0
libtpu: 0.0.40
codegen_flags: <defaults>
</compile_context>

<pallas_src>
import functools
import itertools

import numpy as np

import jax
import jax.numpy as jnp
from jax.experimental import pallas as pl
from jax.experimental.pallas import tpu as pltpu


_LANE = 128          # padded class-axis width
_M_SUB = 8           # max targets per image (padded to one sublane group)
_NEG_PAD = -1e30     # class-axis padding value (acts like -inf, stays finite)
_CE_CHUNK = 1024     # row-chunk size for the fused loss kernel (multiple of 8)


def _round_up(x, m):
    return ((x + m - 1) // m) * m


# ----------------------------------------------------------------------------
# Pallas kernels
# ----------------------------------------------------------------------------
def _cost_matrix_kernel(logits_ref, pboxt_ref, tids_ref, tbox_ref, cost_ref,
                        *, w_class, w_bbox, w_giou):
    """DETR matching cost for a block of bt images, in (targets, queries) form.

    logits_ref : VMEM (bt, N_pad, C_pad) f32  class logits (class axis padded)
    pboxt_ref  : VMEM (bt, 4, N_pad)     f32  predicted boxes, cxcywh, transposed
    tids_ref   : VMEM (bt, M, 1)         i32  target class ids (padded with 0)
    tbox_ref   : VMEM (bt, M, 4)         f32  target boxes, cxcywh (dummy-padded)
    cost_ref   : VMEM (bt, M, N_pad)     f32  compact cost matrices
    """
    lg = logits_ref[...]                                        # (bt, N, C)
    bt, n, c = lg.shape
    m = tids_ref.shape[1]

    mx = jnp.max(lg, axis=-1, keepdims=True)
    e = jnp.exp(lg - mx)
    denom = jnp.sum(e, axis=-1, keepdims=True)
    probs = e * pl.reciprocal(denom, approx=True)               # softmax (VPU+EUP)

    # --- classification cost: one batched MXU matmul against a one-hot -------
    tids = tids_ref[...]                                        # (bt, M, 1) i32
    cls_iota = jax.lax.broadcasted_iota(jnp.int32, (bt, m, c), 2)
    onehot = (cls_iota == tids).astype(jnp.float32)             # (bt, M, C)
    cost_class = -jnp.einsum('bmc,bnc->bmn', onehot, probs,
                             preferred_element_type=jnp.float32)  # (bt, M, N)

    # --- box terms: (bt,M,1) target columns vs (bt,1,N) pred rows ------------
    tb = tbox_ref[...]                                          # (bt, M, 4)
    tcx, tcy, tw, th = tb[..., 0:1], tb[..., 1:2], tb[..., 2:3], tb[..., 3:4]
    pb = pboxt_ref[...]                                         # (bt, 4, N)
    ocx, ocy, ow, oh = pb[:, 0:1, :], pb[:, 1:2, :], pb[:, 2:3, :], pb[:, 3:4, :]

    cost_bbox = (jnp.abs(tcx - ocx) + jnp.abs(tcy - ocy)
                 + jnp.abs(tw - ow) + jnp.abs(th - oh))         # (bt, M, N)

    ax0, ay0 = ocx - 0.5 * ow, ocy - 0.5 * oh                   # pred corners
    ax1, ay1 = ocx + 0.5 * ow, ocy + 0.5 * oh
    bx0, by0 = tcx - 0.5 * tw, tcy - 0.5 * th                   # target corners
    bx1, by1 = tcx + 0.5 * tw, tcy + 0.5 * th
    area_a = (ax1 - ax0) * (ay1 - ay0)
    area_b = (bx1 - bx0) * (by1 - by0)
    iw = jnp.maximum(jnp.minimum(ax1, bx1) - jnp.maximum(ax0, bx0), 0.0)
    ih = jnp.maximum(jnp.minimum(ay1, by1) - jnp.maximum(ay0, by0), 0.0)
    inter = iw * ih
    union = area_a + area_b - inter
    iou = inter * pl.reciprocal(union, approx=True)             # matcher only needs ordering
    ew = jnp.maximum(jnp.maximum(ax1, bx1) - jnp.minimum(ax0, bx0), 0.0)
    eh = jnp.maximum(jnp.maximum(ay1, by1) - jnp.minimum(ay0, by0), 0.0)
    area_e = ew * eh
    # faithful to the reference formula: iou - (area_e - iou*area_e) / area_e
    giou = iou - (area_e - iou * area_e) * pl.reciprocal(area_e, approx=True)

    cost_ref[...] = w_class * cost_class + w_bbox * cost_bbox + w_giou * (-giou)


def _losses_kernel(logits_ref, tclass_ref, cemask_ref, pbox_ref, tbox_ref, bmask_ref,
                   ce_ref, l1_ref, giou_ref, *, inv_rows, inv_imgs):
    """Fused CE + matched-box L1/GIoU losses over one row chunk of B*N_pad rows."""
    step = pl.program_id(0)

    @pl.when(step == 0)
    def _():
        ce_ref[...] = jnp.zeros_like(ce_ref)
        l1_ref[...] = jnp.zeros_like(l1_ref)
        giou_ref[...] = jnp.zeros_like(giou_ref)

    # ---- cross entropy (mean over real query rows) --------------------------
    lg = logits_ref[...]                                        # (R, C)
    r, c = lg.shape
    mx = jnp.max(lg, axis=-1, keepdims=True)
    shl = lg - mx
    lse = jnp.log(jnp.sum(jnp.exp(shl), axis=-1, keepdims=True))    # (R, 1)
    cls_iota = jax.lax.broadcasted_iota(jnp.int32, (r, c), 1)
    tgt = tclass_ref[...]                                       # (R, 1) i32
    picked = jnp.sum(jnp.where(cls_iota == tgt, shl, 0.0),
                     axis=-1, keepdims=True)                    # (R, 1)
    nll = (lse - picked) * cemask_ref[...]
    ce_ref[...] += jnp.sum(nll, axis=0, keepdims=True)

    # ---- matched-box L1 + "GIoU" terms (masked rows, no gather) -------------
    s = pbox_ref[...]                                           # (R, 4) pred cxcywh
    t = tbox_ref[...]                                           # (R, 4) scattered tgt
    bm = bmask_ref[...]                                         # (R, 1)

    l1 = jnp.sum(jnp.abs(s - t), axis=-1, keepdims=True)        # (R, 1)
    l1_ref[...] += jnp.sum(jnp.where(bm > 0, l1, 0.0), axis=0, keepdims=True)

    scx, scy, sw, sh = s[:, 0:1], s[:, 1:2], s[:, 2:3], s[:, 3:4]
    tcx, tcy, tw, th = t[:, 0:1], t[:, 1:2], t[:, 2:3], t[:, 3:4]
    sx0, sy0 = scx - 0.5 * sw, scy - 0.5 * sh
    sx1, sy1 = scx + 0.5 * sw, scy + 0.5 * sh
    tx0, ty0 = tcx - 0.5 * tw, tcy - 0.5 * th
    tx1, ty1 = tcx + 0.5 * tw, tcy + 0.5 * th
    area_s = (sx1 - sx0) * (sy1 - sy0)
    area_t = (tx1 - tx0) * (ty1 - ty0)
    iw = jnp.maximum(jnp.minimum(sx1, tx1) - jnp.maximum(sx0, tx0), 0.0)
    ih = jnp.maximum(jnp.minimum(sy1, ty1) - jnp.maximum(sy0, ty0), 0.0)
    inter = iw * ih
    union = area_s + area_t - inter
    iou = inter / union                                         # exact for the loss
    ew = jnp.maximum(jnp.maximum(sx1, tx1) - jnp.minimum(sx0, tx0), 0.0)
    eh = jnp.maximum(jnp.maximum(sy1, ty1) - jnp.minimum(sy0, ty0), 0.0)
    area_e = ew * eh
    giou = iou - (area_e - iou * area_e) / area_e               # (R, 1)
    giou_ref[...] += jnp.sum(jnp.where(bm > 0, 1.0 - giou, 0.0),
                             axis=0, keepdims=True)

    @pl.when(step == pl.num_programs(0) - 1)
    def _():
        ce_ref[...] = ce_ref[...] * inv_rows
        l1_ref[...] = l1_ref[...] * inv_imgs
        giou_ref[...] = giou_ref[...] * inv_imgs


# ----------------------------------------------------------------------------
# pallas_call wrappers
# ----------------------------------------------------------------------------
def pallas_cost_matrix(logits_pad, pboxes_t, tgt_ids, tgt_boxes, *, bt,
                       w_class=1.0, w_bbox=5.0, w_giou=2.0):
    """One launch for all images; compact (B_pad, M, N_pad) cost matrices."""
    B_pad, N_pad, C_pad = logits_pad.shape
    M = tgt_ids.shape[1]
    n_steps = B_pad // bt
    kern = functools.partial(_cost_matrix_kernel, w_class=float(w_class),
                             w_bbox=float(w_bbox), w_giou=float(w_giou))
    return pl.pallas_call(
        kern,
        out_shape=jax.ShapeDtypeStruct((B_pad, M, N_pad), jnp.float32),
        grid=(n_steps,),
        in_specs=[pl.BlockSpec((bt, N_pad, C_pad), lambda i: (i, 0, 0)),
                  pl.BlockSpec((bt, 4, N_pad), lambda i: (i, 0, 0)),
                  pl.BlockSpec((bt, M, 1), lambda i: (i, 0, 0)),
                  pl.BlockSpec((bt, M, 4), lambda i: (i, 0, 0))],
        out_specs=pl.BlockSpec((bt, M, N_pad), lambda i: (i, 0, 0)),
        compiler_params=pltpu.CompilerParams(
            dimension_semantics=("parallel",)),   # 2 steps -> both TCs on v7x
    )(logits_pad, pboxes_t, tgt_ids, tgt_boxes)


def pallas_losses(logits_flat, tclass, ce_mask, pbox_flat, tbox_flat, box_mask,
                  *, inv_rows, inv_imgs, chunk):
    """Single fused launch: CE + box L1 + GIoU, row-chunked with accumulation."""
    R_pad, C = logits_flat.shape
    n_chunks = R_pad // chunk
    kern = functools.partial(_losses_kernel, inv_rows=float(inv_rows),
                             inv_imgs=float(inv_imgs))
    out11 = jax.ShapeDtypeStruct((1, 1), jnp.float32)
    spec11 = pl.BlockSpec((1, 1), lambda i: (0, 0))
    return pl.pallas_call(
        kern,
        out_shape=(out11, out11, out11),
        grid=(n_chunks,),
        in_specs=[pl.BlockSpec((chunk, C), lambda i: (i, 0)),
                  pl.BlockSpec((chunk, 1), lambda i: (i, 0)),
                  pl.BlockSpec((chunk, 1), lambda i: (i, 0)),
                  pl.BlockSpec((chunk, 4), lambda i: (i, 0)),
                  pl.BlockSpec((chunk, 4), lambda i: (i, 0)),
                  pl.BlockSpec((chunk, 1), lambda i: (i, 0))],
        out_specs=(spec11, spec11, spec11),
        compiler_params=pltpu.CompilerParams(
            dimension_semantics=("arbitrary",)),  # accumulator axis
    )(logits_flat.astype(jnp.float32), tclass, ce_mask,
      pbox_flat.astype(jnp.float32), tbox_flat, box_mask)


# ----------------------------------------------------------------------------
# Host-side glue (box helpers, Hungarian assignment, loss orchestration)
# ----------------------------------------------------------------------------
def _np_xyxy_to_cxcywh(b):
    x0, y0, x1, y1 = b[..., 0], b[..., 1], b[..., 2], b[..., 3]
    return np.stack([(x0 + x1) / 2, (y0 + y1) / 2, x1 - x0, y1 - y0], axis=-1)


def _np_cxcywh_to_xyxy(b):
    xc, yc, w, h = b[..., 0], b[..., 1], b[..., 2], b[..., 3]
    return np.stack([xc - 0.5 * w, yc - 0.5 * h, xc + 0.5 * w, yc + 0.5 * h], axis=-1)


def _np_giou_variant(b1, b2):
    area1 = (b1[:, 2] - b1[:, 0]) * (b1[:, 3] - b1[:, 1])
    area2 = (b2[:, 2] - b2[:, 0]) * (b2[:, 3] - b2[:, 1])
    lt = np.maximum(b1[:, None, :2], b2[None, :, :2])
    rb = np.minimum(b1[:, None, 2:], b2[None, :, 2:])
    wh = np.clip(rb - lt, 0, None)
    inter = wh[..., 0] * wh[..., 1]
    union = area1[:, None] + area2[None, :] - inter
    iou = inter / union
    lt_e = np.minimum(b1[:, None, :2], b2[None, :, :2])
    rb_e = np.maximum(b1[:, None, 2:], b2[None, :, 2:])
    wh_e = np.clip(rb_e - lt_e, 0, None)
    area_e = wh_e[..., 0] * wh_e[..., 1]
    return iou - (area_e - iou * area_e) / area_e


def _linear_sum_assignment_bruteforce(cost):
    # TODO(synk): scipy.optimize.linear_sum_assignment (Hungarian) has no Pallas
    # equivalent; exact brute force for the small target counts used here.
    n, m = cost.shape
    assert m <= n
    best_rows, best_cost = None, np.inf
    for rows in itertools.permutations(range(n), m):
        c = float(cost[list(rows), list(range(m))].sum())
        if c < best_cost:
            best_cost, best_rows = c, rows
    rows = np.asarray(best_rows, np.int64)
    cols = np.arange(m, dtype=np.int64)
    order = np.argsort(rows)
    return rows[order], cols[order]


class LossFunctionPallas:
    """JAX/Pallas port of LossFunction (HungarianMatcher + labels/boxes losses)."""

    def __init__(self, num_classes=91, losses=("labels", "boxes")):
        self.num_classes = num_classes
        self.losses = list(losses)
        self.weight_dict = {"loss_ce": 1, "loss_bbox": 5, "loss_giou": 2}
        # matcher weights (HungarianMatcher defaults)
        self.cost_class, self.cost_bbox, self.cost_giou = 1.0, 5.0, 2.0

    # ---------------- matching ----------------
    def _match(self, logits_pad, pboxes_pad, targets, n_real):
        B, N_pad, _ = logits_pad.shape
        n_steps = 2 if B >= 2 else 1          # >=2 grid steps for v7x's 2 TCs
        bt = -(-B // n_steps)                 # fuse bt images per step (v5e/v6e)
        B_pad = n_steps * bt

        tids = np.zeros((B_pad, _M_SUB, 1), np.int32)
        # dummy target box (cx=cy=0.5, w=h=1) keeps padded entries finite
        tbox = np.zeros((B_pad, _M_SUB, 4), np.float32)
        tbox[..., 0] = 0.5
        tbox[..., 1] = 0.5
        tbox[..., 2] = 1.0
        tbox[..., 3] = 1.0

        nts = np.zeros((B,), np.int32)
        tnorm_per_img = []
        for b in range(B):
            labels = np.asarray(targets[b]["labels"])
            m = int(labels.size)
            assert m <= _M_SUB, "more than 8 targets per image not supported"
            nts[b] = m
            if m:
                boxes_xyxy = np.asarray(targets[b]["boxes"], np.float32)
                tnorm = np.clip(_np_xyxy_to_cxcywh(boxes_xyxy) / 640.0,
                                0.0, 1.0).astype(np.float32)
                tids[b, :m, 0] = labels.astype(np.int32)
                tbox[b, :m, :] = tnorm
                tnorm_per_img.append(tnorm)
            else:
                tnorm_per_img.append(np.zeros((0, 4), np.float32))

        lg, pb = logits_pad, pboxes_pad
        if B_pad != B:
            lg = jnp.pad(lg, ((0, B_pad - B), (0, 0), (0, 0)))
            pb = jnp.pad(pb, ((0, B_pad - B), (0, 0), (0, 0)), constant_values=0.5)
        pbt = jnp.transpose(pb, (0, 2, 1))              # (B_pad, 4, N_pad)

        cost = pallas_cost_matrix(lg, pbt, jnp.asarray(tids), jnp.asarray(tbox),
                                  bt=bt, w_class=self.cost_class,
                                  w_bbox=self.cost_bbox, w_giou=self.cost_giou)
        # single, tiny host sync for matching (compact (B_pad, 8, N_pad) slab)
        cost_np = np.asarray(jax.device_get(cost))

        indices = []
        for b in range(B):
            m = int(nts[b])
            if m == 0:
                indices.append((np.zeros(0, np.int64), np.zeros(0, np.int64)))
                continue
            indices.append(_linear_sum_assignment_bruteforce(
                cost_np[b, :m, :n_real].T))             # (queries, targets)
        return indices, tnorm_per_img

    # ---------------- full forward ----------------
    def __call__(self, outputs, targets):
        pred_logits = outputs["pred_logits"]
        pred_boxes = outputs["pred_boxes"]
        B, N, C = pred_logits.shape
        n_imgs = len(targets)

        N_pad = _round_up(N, 8)
        C_pad = _round_up(C, _LANE)

        logits_pad = pred_logits.astype(jnp.float32)
        if C_pad != C:
            logits_pad = jnp.pad(logits_pad, ((0, 0), (0, 0), (0, C_pad - C)),
                                 constant_values=_NEG_PAD)
        if N_pad != N:
            logits_pad = jnp.pad(logits_pad, ((0, 0), (0, N_pad - N), (0, 0)))
        pboxes_pad = pred_boxes.astype(jnp.float32)
        if N_pad != N:
            pboxes_pad = jnp.pad(pboxes_pad, ((0, 0), (0, N_pad - N), (0, 0)),
                                 constant_values=0.5)

        indices, tnorm_per_img = self._match(logits_pad, pboxes_pad, targets, N)

        # ---- host-side construction of per-row targets / masks (host data) --
        R0 = B * N_pad
        chunk = min(_CE_CHUNK, R0)                 # both multiples of 8
        R_pad = _round_up(R0, chunk)

        tclass = np.full((R_pad, 1), self.num_classes - 1, np.int32)
        ce_mask = np.zeros((R_pad, 1), np.float32)
        tbox_flat = np.zeros((R_pad, 4), np.float32)
        box_mask = np.zeros((R_pad, 1), np.float32)
        for b in range(B):
            ce_mask[b * N_pad: b * N_pad + N, 0] = 1.0
            src, tgt = indices[b]
            if len(src):
                rows = b * N_pad + np.asarray(src, np.int64)
                tclass[rows, 0] = np.asarray(
                    targets[b]["labels"])[np.asarray(tgt)].astype(np.int32)
                tbox_flat[rows, :] = tnorm_per_img[b][np.asarray(tgt)]
                box_mask[rows, 0] = 1.0

        logits_flat = logits_pad.reshape(R0, C_pad)
        pbox_flat = pboxes_pad.reshape(R0, 4)
        if R_pad != R0:
            logits_flat = jnp.pad(logits_flat, ((0, R_pad - R0), (0, 0)))
            pbox_flat = jnp.pad(pbox_flat, ((0, R_pad - R0), (0, 0)),
                                constant_values=0.5)

        ce, l1, gi = pallas_losses(
            logits_flat, jnp.asarray(tclass), jnp.asarray(ce_mask),
            pbox_flat, jnp.asarray(tbox_flat), jnp.asarray(box_mask),
            inv_rows=1.0 / float(B * N), inv_imgs=1.0 / float(n_imgs),
            chunk=chunk)

        losses = {}
        if "labels" in self.losses:
            losses["loss_ce"] = ce[0, 0]
        if "boxes" in self.losses:
            losses["loss_bbox"] = l1[0, 0]
            losses["loss_giou"] = gi[0, 0]
        total = sum(losses[k] * self.weight_dict[k] for k in losses)
        losses["total_loss"] = total
        return losses


# ----------------------------------------------------------------------------
# Pure-numpy reference (mirrors the PyTorch semantics) for verification
# ----------------------------------------------------------------------------
def reference_losses(pred_logits, pred_boxes, targets, num_classes=91):
    pred_logits = np.asarray(pred_logits, np.float64)
    pred_boxes = np.asarray(pred_boxes, np.float64)
    B, N, C = pred_logits.shape
    sh = pred_logits - pred_logits.max(-1, keepdims=True)
    probs = np.exp(sh) / np.exp(sh).sum(-1, keepdims=True)

    indices = []
    for b in range(B):
        labels = np.asarray(targets[b]["labels"])
        if labels.size == 0:
            indices.append((np.zeros(0, np.int64), np.zeros(0, np.int64)))
            continue
        tb = np.asarray(targets[b]["boxes"], np.float64)
        t_norm = np.clip(_np_xyxy_to_cxcywh(tb) / 640.0, 0.0, 1.0)
        cost_class = -probs[b][:, labels]
        cost_bbox = np.abs(pred_boxes[b][:, None, :] - t_norm[None, :, :]).sum(-1)
        giou = _np_giou_variant(_np_cxcywh_to_xyxy(pred_boxes[b]),
                                _np_cxcywh_to_xyxy(t_norm))
        cmat = 1.0 * cost_class + 5.0 * cost_bbox + 2.0 * (-giou)
        indices.append(_linear_sum_assignment_bruteforce(cmat))

    # labels loss
    target_classes = np.full((B, N), num_classes - 1, np.int64)
    for b, (src, tgt) in enumerate(indices):
        if len(src):
            target_classes[b, src] = np.asarray(targets[b]["labels"])[tgt]
    lse = np.log(np.exp(sh).sum(-1))
    picked = np.take_along_axis(sh, target_classes[..., None], axis=-1)[..., 0]
    loss_ce = (lse - picked).mean()

    # box losses
    src_boxes = np.concatenate([pred_boxes[b][src]
                                for b, (src, _) in enumerate(indices) if len(src)], 0)
    tgt_boxes = np.concatenate(
        [np.clip(_np_xyxy_to_cxcywh(
            np.asarray(targets[b]["boxes"], np.float64)[tgt]) / 640.0, 0.0, 1.0)
         for b, (_, tgt) in enumerate(indices) if len(tgt)], 0)
    loss_bbox = np.abs(src_boxes - tgt_boxes).sum() / len(targets)
    giou_d = np.diag(_np_giou_variant(_np_cxcywh_to_xyxy(src_boxes),
                                      _np_cxcywh_to_xyxy(tgt_boxes)))
    loss_giou = (1.0 - giou_d).sum() / len(targets)

    total = loss_ce * 1 + loss_bbox * 5 + loss_giou * 2
    return {"loss_ce": loss_ce, "loss_bbox": loss_bbox,
            "loss_giou": loss_giou, "total_loss": total}


# ----------------------------------------------------------------------------
if __name__ == "__main__":
    key = jax.random.PRNGKey(0)
    kl, kb, kt1, kt2 = jax.random.split(key, 4)

    B, N, num_classes = 2, 8, 91
    pred_logits = jax.random.normal(kl, (B, N, num_classes), dtype=jnp.float32)
    # predicted boxes in normalized cxcywh (DETR convention)
    pred_boxes = jax.random.uniform(kb, (B, N, 4), dtype=jnp.float32,
                                    minval=0.05, maxval=0.5)
    outputs = {"pred_logits": pred_logits, "pred_boxes": pred_boxes}

    def make_target(kk, n_obj):
        k1, k2, k3 = jax.random.split(kk, 3)
        xy0 = np.asarray(jax.random.uniform(k1, (n_obj, 2), minval=0.0, maxval=400.0))
        wh = np.asarray(jax.random.uniform(k2, (n_obj, 2), minval=20.0, maxval=200.0))
        boxes = np.concatenate([xy0, xy0 + wh], axis=1).astype(np.float32)  # xyxy px
        labels = np.asarray(jax.random.randint(k3, (n_obj,), 0, num_classes - 1),
                            np.int64)
        return {"labels": labels, "boxes": boxes}

    targets = [make_target(kt1, 3), make_target(kt2, 2)]

    loss_fn = LossFunctionPallas(num_classes=num_classes)
    losses = loss_fn(outputs, targets)
    jax.block_until_ready(losses["total_loss"])

    ref = reference_losses(np.asarray(pred_logits), np.asarray(pred_boxes),
                           targets, num_classes)
    for k in ("loss_ce", "loss_bbox", "loss_giou", "total_loss"):
        np.testing.assert_allclose(float(losses[k]), float(ref[k]),
                                   rtol=5e-3, atol=5e-3)

    print("KERNEL_OK")
</pallas_src>

<mosaic_0001>
module attributes {stable_mosaic.version = 11 : i64} {
  func.func @_cost_matrix_kernel(%arg0: i32, %arg1: memref<1x8x128xf32, #tpu.memory_space<vmem>>, %arg2: memref<1x4x8xf32, #tpu.memory_space<vmem>>, %arg3: memref<1x8x1xi32, #tpu.memory_space<vmem>>, %arg4: memref<1x8x4xf32, #tpu.memory_space<vmem>>, %arg5: memref<1x8x8xf32, #tpu.memory_space<vmem>>) attributes {dimension_semantics = [#tpu.dimension_semantics<parallel>], iteration_bounds = array<i64: 2>, scalar_prefetch = 0 : i64, scratch_operands = 0 : i64, tpu.core_type = #tpu.core_type<tc>, window_params = [{transform_indices = @transform_0, window_bounds = array<i64: 1, 8, 128>}, {transform_indices = @transform_1, window_bounds = array<i64: 1, 4, 8>}, {transform_indices = @transform_2, window_bounds = array<i64: 1, 8, 1>}, {transform_indices = @transform_3, window_bounds = array<i64: 1, 8, 4>}, {transform_indices = @transform_4, window_bounds = array<i64: 1, 8, 8>}]} {
    %c0 = arith.constant 0 : index
    %c0_0 = arith.constant 0 : index
    %c0_1 = arith.constant 0 : index
    %0 = vector.load %arg1[%c0, %c0_0, %c0_1] : memref<1x8x128xf32, #tpu.memory_space<vmem>>, vector<1x8x128xf32>
    %cst = arith.constant dense<0xFF800000> : vector<1x8xf32>
    %1 = vector.multi_reduction <maximumf>, %0, %cst [2] : vector<1x8x128xf32> to vector<1x8xf32>
    %2 = vector.shape_cast %1 : vector<1x8xf32> to vector<1x8x1xf32>
    %3 = vector.broadcast %2 : vector<1x8x1xf32> to vector<1x8x128xf32>
    %4 = arith.subf %0, %3 : vector<1x8x128xf32>
    %5 = math.exp %4 : vector<1x8x128xf32>
    %cst_2 = arith.constant dense<0.000000e+00> : vector<1x8xf32>
    %6 = vector.multi_reduction <add>, %5, %cst_2 [2] : vector<1x8x128xf32> to vector<1x8xf32>
    %7 = vector.shape_cast %6 : vector<1x8xf32> to vector<1x8x1xf32>
    %8 = tpu.reciprocal %7 {approx = true} : vector<1x8x1xf32> -> vector<1x8x1xf32>
    %9 = vector.broadcast %8 : vector<1x8x1xf32> to vector<1x8x128xf32>
    %10 = arith.mulf %5, %9 : vector<1x8x128xf32>
    %c0_3 = arith.constant 0 : index
    %c0_4 = arith.constant 0 : index
    %c0_5 = arith.constant 0 : index
    %11 = vector.load %arg3[%c0_3, %c0_4, %c0_5] : memref<1x8x1xi32, #tpu.memory_space<vmem>>, vector<1x8x1xi32>
    %12 = tpu.iota {dimensions = array<i32: 2>} : vector<1x8x128xi32>
    %13 = vector.broadcast %11 : vector<1x8x1xi32> to vector<1x8x128xi32>
    %14 = arith.cmpi eq, %12, %13 : vector<1x8x128xi32>
    %15 = arith.extui %14 : vector<1x8x128xi1> to vector<1x8x128xi32>
    %16 = arith.sitofp %15 : vector<1x8x128xi32> to vector<1x8x128xf32>
    "tpu.trace_start"() <{level = 10 : i32, message = "bmc,bnc->bmn"}> : () -> ()
    %cst_6 = arith.constant dense<0.000000e+00> : vector<1x8x8xf32>
    %17 = tpu.matmul %16, %10, %cst_6 {dimension_numbers = #tpu.dot_dimension_numbers<[2], [2], [1], [1], [0, 0, 0, 1, 1, 1], [0], [0]>} : vector<1x8x128xf32>, vector<1x8x128xf32>, vector<1x8x8xf32> -> vector<1x8x8xf32>
    "tpu.trace_stop"() : () -> ()
    %cst_7 = arith.constant 0.000000e+00 : f32
    %18 = vector.broadcast %cst_7 : f32 to vector<1x8x8xf32>
    %19 = arith.subf %18, %17 : vector<1x8x8xf32>
    %c0_8 = arith.constant 0 : index
    %c0_9 = arith.constant 0 : index
    %c0_10 = arith.constant 0 : index
    %20 = vector.load %arg4[%c0_8, %c0_9, %c0_10] : memref<1x8x4xf32, #tpu.memory_space<vmem>>, vector<1x8x4xf32>
    %21 = vector.extract_strided_slice %20 {offsets = [0, 0, 0], sizes = [1, 8, 1], strides = [1, 1, 1]} : vector<1x8x4xf32> to vector<1x8x1xf32>
    %22 = vector.extract_strided_slice %20 {offsets = [0, 0, 1], sizes = [1, 8, 1], strides = [1, 1, 1]} : vector<1x8x4xf32> to vector<1x8x1xf32>
    %23 = vector.extract_strided_slice %20 {offsets = [0, 0, 2], sizes = [1, 8, 1], strides = [1, 1, 1]} : vector<1x8x4xf32> to vector<1x8x1xf32>
    %24 = vector.extract_strided_slice %20 {offsets = [0, 0, 3], sizes = [1, 8, 1], strides = [1, 1, 1]} : vector<1x8x4xf32> to vector<1x8x1xf32>
    %c0_11 = arith.constant 0 : index
    %c0_12 = arith.constant 0 : index
    %c0_13 = arith.constant 0 : index
    %25 = vector.load %arg2[%c0_11, %c0_12, %c0_13] : memref<1x4x8xf32, #tpu.memory_space<vmem>>, vector<1x4x8xf32>
    %26 = vector.extract_strided_slice %25 {offsets = [0, 0, 0], sizes = [1, 1, 8], strides = [1, 1, 1]} : vector<1x4x8xf32> to vector<1x1x8xf32>
    %27 = vector.extract_strided_slice %25 {offsets = [0, 1, 0], sizes = [1, 1, 8], strides = [1, 1, 1]} : vector<1x4x8xf32> to vector<1x1x8xf32>
    %28 = vector.extract_strided_slice %25 {offsets = [0, 2, 0], sizes = [1, 1, 8], strides = [1, 1, 1]} : vector<1x4x8xf32> to vector<1x1x8xf32>
    %29 = vector.extract_strided_slice %25 {offsets = [0, 3, 0], sizes = [1, 1, 8], strides = [1, 1, 1]} : vector<1x4x8xf32> to vector<1x1x8xf32>
    %30 = vector.broadcast %21 : vector<1x8x1xf32> to vector<1x8x8xf32>
    %31 = vector.broadcast %26 : vector<1x1x8xf32> to vector<1x8x8xf32>
    %32 = arith.subf %30, %31 : vector<1x8x8xf32>
    %33 = math.absf %32 : vector<1x8x8xf32>
    %34 = vector.broadcast %22 : vector<1x8x1xf32> to vector<1x8x8xf32>
    %35 = vector.broadcast %27 : vector<1x1x8xf32> to vector<1x8x8xf32>
    %36 = arith.subf %34, %35 : vector<1x8x8xf32>
    %37 = math.absf %36 : vector<1x8x8xf32>
    %38 = arith.addf %33, %37 : vector<1x8x8xf32>
    %39 = vector.broadcast %23 : vector<1x8x1xf32> to vector<1x8x8xf32>
    %40 = vector.broadcast %28 : vector<1x1x8xf32> to vector<1x8x8xf32>
    %41 = arith.subf %39, %40 : vector<1x8x8xf32>
    %42 = math.absf %41 : vector<1x8x8xf32>
    %43 = arith.addf %38, %42 : vector<1x8x8xf32>
    %44 = vector.broadcast %24 : vector<1x8x1xf32> to vector<1x8x8xf32>
    %45 = vector.broadcast %29 : vector<1x1x8xf32> to vector<1x8x8xf32>
    %46 = arith.subf %44, %45 : vector<1x8x8xf32>
    %47 = math.absf %46 : vector<1x8x8xf32>
    %48 = arith.addf %43, %47 : vector<1x8x8xf32>
    %cst_14 = arith.constant 5.000000e-01 : f32
    %49 = vector.broadcast %cst_14 : f32 to vector<1x1x8xf32>
    %50 = arith.mulf %49, %28 : vector<1x1x8xf32>
    %51 = arith.subf %26, %50 : vector<1x1x8xf32>
    %cst_15 = arith.constant 5.000000e-01 : f32
    %52 = vector.broadcast %cst_15 : f32 to vector<1x1x8xf32>
    %53 = arith.mulf %52, %29 : vector<1x1x8xf32>
    %54 = arith.subf %27, %53 : vector<1x1x8xf32>
    %cst_16 = arith.constant 5.000000e-01 : f32
    %55 = vector.broadcast %cst_16 : f32 to vector<1x1x8xf32>
    %56 = arith.mulf %55, %28 : vector<1x1x8xf32>
    %57 = arith.addf %26, %56 : vector<1x1x8xf32>
    %cst_17 = arith.constant 5.000000e-01 : f32
    %58 = vector.broadcast %cst_17 : f32 to vector<1x1x8xf32>
    %59 = arith.mulf %58, %29 : vector<1x1x8xf32>
    %60 = arith.addf %27, %59 : vector<1x1x8xf32>
    %cst_18 = arith.constant 5.000000e-01 : f32
    %61 = vector.broadcast %cst_18 : f32 to vector<1x8x1xf32>
    %62 = arith.mulf %61, %23 : vector<1x8x1xf32>
    %63 = arith.subf %21, %62 : vector<1x8x1xf32>
    %cst_19 = arith.constant 5.000000e-01 : f32
    %64 = vector.broadcast %cst_19 : f32 to vector<1x8x1xf32>
    %65 = arith.mulf %64, %24 : vector<1x8x1xf32>
    %66 = arith.subf %22, %65 : vector<1x8x1xf32>
    %cst_20 = arith.constant 5.000000e-01 : f32
    %67 = vector.broadcast %cst_20 : f32 to vector<1x8x1xf32>
    %68 = arith.mulf %67, %23 : vector<1x8x1xf32>
    %69 = arith.addf %21, %68 : vector<1x8x1xf32>
    %cst_21 = arith.constant 5.000000e-01 : f32
    %70 = vector.broadcast %cst_21 : f32 to vector<1x8x1xf32>
    %71 = arith.mulf %70, %24 : vector<1x8x1xf32>
    %72 = arith.addf %22, %71 : vector<1x8x1xf32>
    %73 = arith.subf %57, %51 : vector<1x1x8xf32>
    %74 = arith.subf %60, %54 : vector<1x1x8xf32>
    %75 = arith.mulf %73, %74 : vector<1x1x8xf32>
    %76 = arith.subf %69, %63 : vector<1x8x1xf32>
    %77 = arith.subf %72, %66 : vector<1x8x1xf32>
    %78 = arith.mulf %76, %77 : vector<1x8x1xf32>
    %79 = vector.broadcast %57 : vector<1x1x8xf32> to vector<1x8x8xf32>
    %80 = vector.broadcast %69 : vector<1x8x1xf32> to vector<1x8x8xf32>
    %81 = arith.minimumf %79, %80 : vector<1x8x8xf32>
    %82 = vector.broadcast %51 : vector<1x1x8xf32> to vector<1x8x8xf32>
    %83 = vector.broadcast %63 : vector<1x8x1xf32> to vector<1x8x8xf32>
    %84 = arith.maximumf %82, %83 : vector<1x8x8xf32>
    %85 = arith.subf %81, %84 : vector<1x8x8xf32>
    %cst_22 = arith.constant 0.000000e+00 : f32
    %86 = vector.broadcast %cst_22 : f32 to vector<1x8x8xf32>
    %87 = arith.maximumf %85, %86 : vector<1x8x8xf32>
    %88 = vector.broadcast %60 : vector<1x1x8xf32> to vector<1x8x8xf32>
    %89 = vector.broadcast %72 : vector<1x8x1xf32> to vector<1x8x8xf32>
    %90 = arith.minimumf %88, %89 : vector<1x8x8xf32>
    %91 = vector.broadcast %54 : vector<1x1x8xf32> to vector<1x8x8xf32>
    %92 = vector.broadcast %66 : vector<1x8x1xf32> to vector<1x8x8xf32>
    %93 = arith.maximumf %91, %92 : vector<1x8x8xf32>
    %94 = arith.subf %90, %93 : vector<1x8x8xf32>
    %cst_23 = arith.constant 0.000000e+00 : f32
    %95 = vector.broadcast %cst_23 : f32 to vector<1x8x8xf32>
    %96 = arith.maximumf %94, %95 : vector<1x8x8xf32>
    %97 = arith.mulf %87, %96 : vector<1x8x8xf32>
    %98 = vector.broadcast %75 : vector<1x1x8xf32> to vector<1x8x8xf32>
    %99 = vector.broadcast %78 : vector<1x8x1xf32> to vector<1x8x8xf32>
    %100 = arith.addf %98, %99 : vector<1x8x8xf32>
    %101 = arith.subf %100, %97 : vector<1x8x8xf32>
    %102 = tpu.reciprocal %101 {approx = true} : vector<1x8x8xf32> -> vector<1x8x8xf32>
    %103 = arith.mulf %97, %102 : vector<1x8x8xf32>
    %104 = vector.broadcast %57 : vector<1x1x8xf32> to vector<1x8x8xf32>
    %105 = vector.broadcast %69 : vector<1x8x1xf32> to vector<1x8x8xf32>
    %106 = arith.maximumf %104, %105 : vector<1x8x8xf32>
    %107 = vector.broadcast %51 : vector<1x1x8xf32> to vector<1x8x8xf32>
    %108 = vector.broadcast %63 : vector<1x8x1xf32> to vector<1x8x8xf32>
    %109 = arith.minimumf %107, %108 : vector<1x8x8xf32>
    %110 = arith.subf %106, %109 : vector<1x8x8xf32>
    %cst_24 = arith.constant 0.000000e+00 : f32
    %111 = vector.broadcast %cst_24 : f32 to vector<1x8x8xf32>
    %112 = arith.maximumf %110, %111 : vector<1x8x8xf32>
    %113 = vector.broadcast %60 : vector<1x1x8xf32> to vector<1x8x8xf32>
    %114 = vector.broadcast %72 : vector<1x8x1xf32> to vector<1x8x8xf32>
    %115 = arith.maximumf %113, %114 : vector<1x8x8xf32>
    %116 = vector.broadcast %54 : vector<1x1x8xf32> to vector<1x8x8xf32>
    %117 = vector.broadcast %66 : vector<1x8x1xf32> to vector<1x8x8xf32>
    %118 = arith.minimumf %116, %117 : vector<1x8x8xf32>
    %119 = arith.subf %115, %118 : vector<1x8x8xf32>
    %cst_25 = arith.constant 0.000000e+00 : f32
    %120 = vector.broadcast %cst_25 : f32 to vector<1x8x8xf32>
    %121 = arith.maximumf %119, %120 : vector<1x8x8xf32>
    %122 = arith.mulf %112, %121 : vector<1x8x8xf32>
    %123 = arith.mulf %103, %122 : vector<1x8x8xf32>
    %124 = arith.subf %122, %123 : vector<1x8x8xf32>
    %125 = tpu.reciprocal %122 {approx = true} : vector<1x8x8xf32> -> vector<1x8x8xf32>
    %126 = arith.mulf %124, %125 : vector<1x8x8xf32>
    %127 = arith.subf %103, %126 : vector<1x8x8xf32>
    %cst_26 = arith.constant 1.000000e+00 : f32
    %128 = vector.broadcast %cst_26 : f32 to vector<1x8x8xf32>
    %129 = arith.mulf %128, %19 : vector<1x8x8xf32>
    %cst_27 = arith.constant 5.000000e+00 : f32
    %130 = vector.broadcast %cst_27 : f32 to vector<1x8x8xf32>
    %131 = arith.mulf %130, %48 : vector<1x8x8xf32>
    %132 = arith.addf %129, %131 : vector<1x8x8xf32>
    %cst_28 = arith.constant 0.000000e+00 : f32
    %133 = vector.broadcast %cst_28 : f32 to vector<1x8x8xf32>
    %134 = arith.subf %133, %127 : vector<1x8x8xf32>
    %cst_29 = arith.constant 2.000000e+00 : f32
    %135 = vector.broadcast %cst_29 : f32 to vector<1x8x8xf32>
    %136 = arith.mulf %135, %134 : vector<1x8x8xf32>
    %137 = arith.addf %132, %136 : vector<1x8x8xf32>
    %c0_30 = arith.constant 0 : index
    %c0_31 = arith.constant 0 : index
    %c0_32 = arith.constant 0 : index
    %138 = vector.load %arg5[%c0_30, %c0_31, %c0_32] : memref<1x8x8xf32, #tpu.memory_space<vmem>>, vector<1x8x8xf32>
    tpu.vector_store %arg5[%c0_30, %c0_31, %c0_32], %137 {strides = array<i32>} : memref<1x8x8xf32, #tpu.memory_space<vmem>>, vector<1x8x8xf32>,
    return
  }
  func.func @transform_0(%arg0: i32) -> (i32, i32, i32) {
    %c0_i32 = arith.constant 0 : i32
    %c0_i32_0 = arith.constant 0 : i32
    %c0_i32_1 = arith.constant 0 : i32
    return %arg0, %c0_i32, %c0_i32_0 : i32, i32, i32
  }
  func.func @transform_1(%arg0: i32) -> (i32, i32, i32) {
    %c0_i32 = arith.constant 0 : i32
    %c0_i32_0 = arith.constant 0 : i32
    %c0_i32_1 = arith.constant 0 : i32
    return %arg0, %c0_i32, %c0_i32_0 : i32, i32, i32
  }
  func.func @transform_2(%arg0: i32) -> (i32, i32, i32) {
    %c0_i32 = arith.constant 0 : i32
    %c0_i32_0 = arith.constant 0 : i32
    %c0_i32_1 = arith.constant 0 : i32
    return %arg0, %c0_i32, %c0_i32_0 : i32, i32, i32
  }
  func.func @transform_3(%arg0: i32) -> (i32, i32, i32) {
    %c0_i32 = arith.constant 0 : i32
    %c0_i32_0 = arith.constant 0 : i32
    %c0_i32_1 = arith.constant 0 : i32
    return %arg0, %c0_i32, %c0_i32_0 : i32, i32, i32
  }
  func.func @transform_4(%arg0: i32) -> (i32, i32, i32) {
    %c0_i32 = arith.constant 0 : i32
    %c0_i32_0 = arith.constant 0 : i32
    %c0_i32_1 = arith.constant 0 : i32
    return %arg0, %c0_i32, %c0_i32_0 : i32, i32, i32
  }
}

</mosaic_0001>

<llo_original>
// kernel: tpu_custom_call.1
$region0: #{tpu_custom_call.1}
  #allocation0 [shape = 'u32[]', space=smem, size = 0x4, offset = 0x4, fixed_abs, tag = 'smem constant byte address 0x4 - core index']
  #allocation1 [shape = 'u32[144,128]{1,0:T(1,128)}', space=vmem, size = 0x12000, scoped, tag = 'internal scratch']
  %s0 = inlined_call_operand.vmem [shape: f32[2,8,128], index: 0, kind: input, shape index: {}]
  %s1 = inlined_call_operand.vmem [shape: f32[2,4,8], index: 1, kind: input, shape index: {}]
  %s2 = inlined_call_operand.vmem [shape: s32[2,8,1], index: 2, kind: input, shape index: {}]
  %s3 = inlined_call_operand.vmem [shape: f32[2,8,4], index: 3, kind: input, shape index: {}]
  %s4 = inlined_call_operand.hbm [shape: f32[2,8,8], index: 4, kind: output, shape index: {}]
  %s5 = sld [smem:[#allocation0]]
  $region49: #{tpu_custom_call.1} parent=0
    _
  %s7 = ssub.s32 1, %s5
  %s8 = scalar_select 0, %s7, %s5
  $region1: #{tpu_custom_call.1} parent=0
    #allocation2 [shape = 'u8[8192]{0}', space=vmem, size = 0x2000, scoped, tag = 'output window, operand 0']
    #allocation3 [shape = 's32[2]{0}', space=sflag, size = 0x8, scoped, tag = 'scoped memory for tpu_custom_call.1']
    %9 = vsyncpa [#allocation3], 0
    %s10 = scalar_lea.sflag [#allocation3], 1
    %11 = vsyncpa %s10, 0
    loop: start=0, step=1, limit=4
    $region2: #{tpu_custom_call.1} parent=1 // loop_pre_header
      _
    $region3: #{tpu_custom_call.1} parent=1 // loop_header
      %s13 = sphi 0, %s17
      %p14 = scmp.ge.s32.totalorder %s13, 4
      %s23 = sphi 0, %s25
      %s26 = sphi 0, %s23
      %s27 = sphi 0, %s26
      %s43 = sphi 0, %s27
      %s49 = sphi 0, %s51
      %s52 = sphi 0, %s49
      %s53 = sphi 0, %s52
      %s69 = sphi 0, %s53
      %s75 = sphi 0, %s77
      %s78 = sphi 0, %s75
      %s79 = sphi 0, %s78
      %s95 = sphi 0, %s79
      %s101 = sphi 0, %s103
      %s104 = sphi 0, %s101
      %s105 = sphi 0, %s104
      %s121 = sphi 0, %s105
      %s127 = sphi 0, %s129
      %s130 = sphi 0, %s127
      %s131 = sphi 0, %s130
      %s147 = sphi 0, %s131
    $region4: #{tpu_custom_call.1} parent=1 // loop_header_branch
      %16 = sbr.rel (%p14) target = $region8
    $region5: #{tpu_custom_call.1} parent=1 // loop_body
      %s18 = ssub.s32 %s13, 1
      %s19 = ssub.s32 %s13, 2
      %s20 = sadd.s32 %s13, 1
      %s21 = ssub.s32 %s13, %s20
      %p22 = scmp.eq.s32.totalorder %s21, 0
      %s24 = sadd.s32 %s23, 1
      %s25 = scalar_select %p22, %s23, %s24
      %p28 = pneg %p22
      %p29 = scmp.eq.s32.totalorder %s13, 1
      %p30 = por %p28, %p29
      %p31 = scmp.ne.s32.totalorder %s23, %s26
      %p32 = scmp.eq.s32.totalorder %s13, 0
      %p33 = por %p31, %p32
      %p34 = scmp.ne.s32.totalorder %s23, %s26
      %p35 = scmp.eq.s32.totalorder %s18, 1
      %p36 = por %p34, %p35
      %p37 = scmp.ne.s32.totalorder %s26, %s27
      %p38 = scmp.eq.s32.totalorder %s18, 0
      %p39 = por %p37, %p38
      %p40 = scmp.ne.s32.totalorder %s26, %s27
      %p41 = scmp.eq.s32.totalorder %s19, 1
      %p42 = por %p40, %p41
      %p44 = scmp.ne.s32.totalorder %s27, %s43
      %p45 = scmp.eq.s32.totalorder %s19, 0
      %p46 = por %p44, %p45
      %s47 = ssub.s32 %s13, %s20
      %p48 = scmp.eq.s32.totalorder %s47, 0
      %s50 = sadd.s32 %s49, 1
      %s51 = scalar_select %p48, %s49, %s50
      %p54 = pneg %p48
      %p55 = scmp.eq.s32.totalorder %s13, 1
      %p56 = por %p54, %p55
      %p57 = scmp.ne.s32.totalorder %s49, %s52
      %p58 = scmp.eq.s32.totalorder %s13, 0
      %p59 = por %p57, %p58
      %p60 = scmp.ne.s32.totalorder %s49, %s52
      %p61 = scmp.eq.s32.totalorder %s18, 1
      %p62 = por %p60, %p61
      %p63 = scmp.ne.s32.totalorder %s52, %s53
      %p64 = scmp.eq.s32.totalorder %s18, 0
      %p65 = por %p63, %p64
      %p66 = scmp.ne.s32.totalorder %s52, %s53
      %p67 = scmp.eq.s32.totalorder %s19, 1
      %p68 = por %p66, %p67
      %p70 = scmp.ne.s32.totalorder %s53, %s69
      %p71 = scmp.eq.s32.totalorder %s19, 0
      %p72 = por %p70, %p71
      %s73 = ssub.s32 %s13, %s20
      %p74 = scmp.eq.s32.totalorder %s73, 0
      %s76 = sadd.s32 %s75, 1
      %s77 = scalar_select %p74, %s75, %s76
      %p80 = pneg %p74
      %p81 = scmp.eq.s32.totalorder %s13, 1
      %p82 = por %p80, %p81
      %p83 = scmp.ne.s32.totalorder %s75, %s78
      %p84 = scmp.eq.s32.totalorder %s13, 0
      %p85 = por %p83, %p84
      %p86 = scmp.ne.s32.totalorder %s75, %s78
      %p87 = scmp.eq.s32.totalorder %s18, 1
      %p88 = por %p86, %p87
      %p89 = scmp.ne.s32.totalorder %s78, %s79
      %p90 = scmp.eq.s32.totalorder %s18, 0
      %p91 = por %p89, %p90
      %p92 = scmp.ne.s32.totalorder %s78, %s79
      %p93 = scmp.eq.s32.totalorder %s19, 1
      %p94 = por %p92, %p93
      %p96 = scmp.ne.s32.totalorder %s79, %s95
      %p97 = scmp.eq.s32.totalorder %s19, 0
      %p98 = por %p96, %p97
      %s99 = ssub.s32 %s13, %s20
      %p100 = scmp.eq.s32.totalorder %s99, 0
      %s102 = sadd.s32 %s101, 1
      %s103 = scalar_select %p100, %s101, %s102
      %p106 = pneg %p100
      %p107 = scmp.eq.s32.totalorder %s13, 1
      %p108 = por %p106, %p107
      %p109 = scmp.ne.s32.totalorder %s101, %s104
      %p110 = scmp.eq.s32.totalorder %s13, 0
      %p111 = por %p109, %p110
      %p112 = scmp.ne.s32.totalorder %s101, %s104
      %p113 = scmp.eq.s32.totalorder %s18, 1
      %p114 = por %p112, %p113
      %p115 = scmp.ne.s32.totalorder %s104, %s105
      %p116 = scmp.eq.s32.totalorder %s18, 0
      %p117 = por %p115, %p116
      %p118 = scmp.ne.s32.totalorder %s104, %s105
      %p119 = scmp.eq.s32.totalorder %s19, 1
      %p120 = por %p118, %p119
      %p122 = scmp.ne.s32.totalorder %s105, %s121
      %p123 = scmp.eq.s32.totalorder %s19, 0
      %p124 = por %p122, %p123
      %s125 = ssub.s32 %s13, %s20
      %p126 = scmp.eq.s32.totalorder %s125, 0
      %s128 = sadd.s32 %s127, 1
      %s129 = scalar_select %p126, %s127, %s128
      %p132 = pneg %p126
      %p133 = scmp.eq.s32.totalorder %s13, 1
      %p134 = por %p132, %p133
      %p135 = scmp.ne.s32.totalorder %s127, %s130
      %p136 = scmp.eq.s32.totalorder %s13, 0
      %p137 = por %p135, %p136
      %p138 = scmp.ne.s32.totalorder %s127, %s130
      %p139 = scmp.eq.s32.totalorder %s18, 1
      %p140 = por %p138, %p139
      %p141 = scmp.ne.s32.totalorder %s130, %s131
      %p142 = scmp.eq.s32.totalorder %s18, 0
      %p143 = por %p141, %p142
      %p144 = scmp.ne.s32.totalorder %s130, %s131
      %p145 = scmp.eq.s32.totalorder %s19, 1
      %p146 = por %p144, %p145
      %p148 = scmp.ne.s32.totalorder %s131, %s147
      %p149 = scmp.eq.s32.totalorder %s19, 0
      %p150 = por %p148, %p149
      %p151 = scmp.le.s32.totalorder 1, %s13
      %p152 = scmp.lt.s32.totalorder %s13, 3
      %p153 = pnand %p151, %p152
      %p154 = pneg %p153
      // Predicated region
      $region9: #{tpu_custom_call.1} parent=5 // pred_check
        _
      $region10: #{tpu_custom_call.1} parent=5 // pred_check_branch
        %156 = sbr.rel (%p153) target = $region12
      $region11: #{tpu_custom_call.1} parent=5 // pred_region
        %s157 = ssub.s32 %s13, 1
      $region12: #{tpu_custom_call.1} parent=5 // pred_fallthru
        _
      %p158 = scmp.lt.s32.totalorder %s13, 2
      // Predicated region
      $region13: #{tpu_custom_call.1} parent=5 // pred_check
        %p159 = pneg %p158
      $region14: #{tpu_custom_call.1} parent=5 // pred_check_branch
        %161 = sbr.rel (%p159) target = $region16
      $region15: #{tpu_custom_call.1} parent=5 // pred_region
        // Predicated region
        $region17: #{tpu_custom_call.1} parent=15 // pred_check
          %p162 = pneg %p33
        $region18: #{tpu_custom_call.1} parent=15 // pred_check_branch
          %164 = sbr.rel (%p162) target = $region20
        $region19: #{tpu_custom_call.1} parent=15 // pred_region
          %p165 = scmp.lt.s32.totalorder %s13, 1
          %s166 = scalar_select %p165, %s13, 1
          %s167 = smul.addr %s166, 8
          %s168 = scalar_lea.vmem %s0, %s167
        $region20: #{tpu_custom_call.1} parent=15 // pred_fallthru
          _
        // Predicated region
        $region21: #{tpu_custom_call.1} parent=15 // pred_check
          %p169 = pneg %p59
        $region22: #{tpu_custom_call.1} parent=15 // pred_check_branch
          %171 = sbr.rel (%p169) target = $region24
        $region23: #{tpu_custom_call.1} parent=15 // pred_region
          %p172 = scmp.lt.s32.totalorder %s13, 1
          %s173 = scalar_select %p172, %s13, 1
          %s174 = smul.addr %s173, 4
          %s175 = scalar_lea.vmem %s1, %s174
        $region24: #{tpu_custom_call.1} parent=15 // pred_fallthru
          _
        // Predicated region
        $region25: #{tpu_custom_call.1} parent=15 // pred_check
          %p176 = pneg %p85
        $region26: #{tpu_custom_call.1} parent=15 // pred_check_branch
          %178 = sbr.rel (%p176) target = $region28
        $region27: #{tpu_custom_call.1} parent=15 // pred_region
          %p179 = scmp.lt.s32.totalorder %s13, 1
          %s180 = scalar_select %p179, %s13, 1
          %s181 = smul.addr %s180, 8
          %s182 = scalar_lea.vmem %s2, %s181
        $region28: #{tpu_custom_call.1} parent=15 // pred_fallthru
          _
        // Predicated region
        $region29: #{tpu_custom_call.1} parent=15 // pred_check
          %p183 = pneg %p111
        $region30: #{tpu_custom_call.1} parent=15 // pred_check_branch
          %185 = sbr.rel (%p183) target = $region32
        $region31: #{tpu_custom_call.1} parent=15 // pred_region
          %p186 = scmp.lt.s32.totalorder %s13, 1
          %s187 = scalar_select %p186, %s13, 1
          %s188 = smul.addr %s187, 8
          %s189 = scalar_lea.vmem %s3, %s188
        $region32: #{tpu_custom_call.1} parent=15 // pred_fallthru
          _
      $region16: #{tpu_custom_call.1} parent=5 // pred_fallthru
        _
      %p190 = scmp.le.s32.totalorder 1, %s13
      %p191 = scmp.lt.s32.totalorder %s13, 3
      %p192 = pnand %p190, %p191
      %p193 = pneg %p192
      // Predicated region
      $region33: #{tpu_custom_call.1} parent=5 // pred_check
        _
      $region34: #{tpu_custom_call.1} parent=5 // pred_check_branch
        %195 = sbr.rel (%p192) target = $region36
      $region35: #{tpu_custom_call.1} parent=5 // pred_region
        %s196 = ssub.s32 %s13, 1
        %p197 = scmp.lt.s32.totalorder %s18, 1
        %s198 = scalar_select %p197, %s18, 1
        %s199 = smul.addr %s198, 8
        %s200 = scalar_lea.vmem %s0, %s199
        %p201 = pneg %p39
        %p202 = pneg %p36
        %p203 = scmp.lt.s32.totalorder %s18, 1
        %s204 = scalar_select %p203, %s18, 1
        %s205 = smul.addr %s204, 4
        %s206 = scalar_lea.vmem %s1, %s205
        %p207 = pneg %p65
        %p208 = pneg %p62
        %p209 = scmp.lt.s32.totalorder %s18, 1
        %s210 = scalar_select %p209, %s18, 1
        %s211 = smul.addr %s210, 8
        %s212 = scalar_lea.vmem %s2, %s211
        %p213 = pneg %p91
        %p214 = pneg %p88
        %p215 = scmp.lt.s32.totalorder %s18, 1
        %s216 = scalar_select %p215, %s18, 1
        %s217 = smul.addr %s216, 8
        %s218 = scalar_lea.vmem %s3, %s217
        %p219 = pneg %p117
        %p220 = pneg %p114
        %p221 = pneg %p143
        %p222 = pneg %p140
        %s223 = sand.u32 %s130, 1
        %s224 = scalar_lea.sflag [#allocation3], %s223
        %s225 = sand.u32 %s130, 1
        %s226 = smul.addr %s225, 8
        %s227 = scalar_lea.vmem [#allocation2], %s226
        %p228 = scmp.lt.s32.totalorder %s18, 1
        %s229 = scalar_select %p228, %s18, 1
        %s230 = smul.addr %s229, 8
        %s231 = scalar_lea.vmem %s0, %s230
        %p232 = scmp.lt.s32.totalorder %s18, 1
        %s233 = scalar_select %p232, %s18, 1
        %s234 = smul.addr %s233, 4
        %s235 = scalar_lea.vmem %s1, %s234
        %p236 = scmp.lt.s32.totalorder %s18, 1
        %s237 = scalar_select %p236, %s18, 1
        %s238 = smul.addr %s237, 8
        %s239 = scalar_lea.vmem %s2, %s238
        %p240 = scmp.lt.s32.totalorder %s18, 1
        %s241 = scalar_select %p240, %s18, 1
        %s242 = smul.addr %s241, 8
        %s243 = scalar_lea.vmem %s3, %s242
        %v244 = vld [vmem:[%s231] sm:$0xff]
        %245 = vmax.xlane.f32.xlu0 %v244
        %v246 = vpop.xlane.xlu0 %245
        %v247 = vsub.f32 %v244, %v246
        %v248 = vmul.f32 %v247, 1.442695
        %v249 = vpow.pop %v248
        %250 = vadd.xlane.f32.xlu0 %v249
        %v251 = vpop.xlane.xlu0 %250
        %v252 = vrcp.pop %v251
        %v253 = vmul.f32 %v249, %v252
        %v254 = vld [vmem:[%s239] sm:$0xff]
        %v255 = vlaneseq
        %v256 = vand.u32 %v255, 127
        %257 = vset.pattern.permute.xlu0 0
        %258 = vperm.xlu0 %257, %v254
        %v259 = vpop.permute.xlu0 %258
        %vm260 = vcmp.eq.s32.totalorder %v256, %v259
        %v261 = vsel %vm260, 1, 0
        %v262 = vcvt.s32.f32 %v261
        %263 = vmatprep.subr.mxu0 0.0
        %264 = vmatpush1.xpose.msra.mxu0 %v253
        %265 = vmatprep.subr.mxu0 0.0
        %266 = vmatpush1.xpose.msra.mxu0 0.0
        %267 = vmatprep.subr.mxu0 0.0
        %268 = vmatpush1.xpose.msra.mxu0 0.0
        %269 = vmatprep.subr.mxu0 0.0
        %270 = vmatpush1.xpose.msra.mxu0 0.0
        %271 = vmatprep.subr.mxu0 0.0
        %272 = vmatpush1.xpose.msra.mxu0 0.0
        %273 = vmatprep.subr.mxu0 0.0
        %274 = vmatpush1.xpose.msra.mxu0 0.0
        %275 = vmatprep.subr.mxu0 0.0
        %276 = vmatpush1.xpose.msra.mxu0 0.0
        %277 = vmatprep.subr.mxu0 0.0
        %278 = vmatpush1.xpose.msra.mxu0 0.0
        %279 = vmatprep.subr.mxu0 0.0
        %280 = vmatpush1.xpose.msra.mxu0 0.0
        %281 = vmatprep.subr.mxu0 0.0
        %282 = vmatpush1.xpose.msra.mxu0 0.0
        %283 = vmatprep.subr.mxu0 0.0
        %284 = vmatpush1.xpose.msra.mxu0 0.0
        %285 = vmatprep.subr.mxu0 0.0
        %286 = vmatpush1.xpose.msra.mxu0 0.0
        %287 = vmatprep.subr.mxu0 0.0
        %288 = vmatpush1.xpose.msra.mxu0 0.0
        %289 = vmatprep.subr.mxu0 0.0
        %290 = vmatpush1.xpose.msra.mxu0 0.0
        %291 = vmatprep.subr.mxu0 0.0
        %292 = vmatpush1.xpose.msra.mxu0 0.0
        %293 = vmatprep.subr.mxu0 0.0
        %294 = vmatpush1.xpose.msra.mxu0 0.0
        %295 = vmatprep.subr.mxu0 0.0
        %296 = vmatpush1.xpose.msra.mxu0 0.0
        %297 = vmatprep.subr.mxu0 0.0
        %298 = vmatpush1.xpose.msra.mxu0 0.0
        %299 = vmatprep.subr.mxu0 0.0
        %300 = vmatpush1.xpose.msra.mxu0 0.0
        %301 = vmatprep.subr.mxu0 0.0
        %302 = vmatpush1.xpose.msra.mxu0 0.0
        %303 = vmatprep.subr.mxu0 0.0
        %304 = vmatpush1.xpose.msra.mxu0 0.0
        %305 = vmatprep.subr.mxu0 0.0
        %306 = vmatpush1.xpose.msra.mxu0 0.0
        %307 = vmatprep.subr.mxu0 0.0
        %308 = vmatpush1.xpose.msra.mxu0 0.0
        %309 = vmatprep.subr.mxu0 0.0
        %310 = vmatpush1.xpose.msra.mxu0 0.0
        %311 = vmatprep.subr.mxu0 0.0
        %312 = vmatpush1.xpose.msra.mxu0 0.0
        %313 = vmatprep.subr.mxu0 0.0
        %314 = vmatpush1.xpose.msra.mxu0 0.0
        %315 = vmatprep.subr.mxu0 0.0
        %316 = vmatpush1.xpose.msra.mxu0 0.0
        %317 = vmatprep.subr.mxu0 0.0
        %318 = vmatpush1.xpose.msra.mxu0 0.0
        %319 = vmatprep.subr.mxu0 0.0
        %320 = vmatpush1.xpose.msra.mxu0 0.0
        %321 = vmatprep.subr.mxu0 0.0
        %322 = vmatpush1.xpose.msra.mxu0 0.0
        %323 = vmatprep.subr.mxu0 0.0
        %324 = vmatpush1.xpose.msra.mxu0 0.0
        %325 = vmatprep.subr.mxu0 0.0
        %326 = vmatpush1.xpose.msra.mxu0 0.0
        %327 = vmatprep.mubr.f32.mxu0 0.0
        %328 = vmatmul.mubr.f32.gmra.mrb[0].mxu0 %v262
        %v329 = vpop.f32.mrb[0].mxu0
        %v330 = vadd.f32 0.0, %v329
        %v331 = vpop.f32.mrb[0].mxu0
        %332 = vdwg.mxu0
        %v333 = vsub.f32 0.0, %v330
        %v334 = vld [vmem:[%s243] sm:$0xff]
        %v335 = vld [vmem:[%s235] sm:$0xf]
        %337 = vset.pattern.permute.xlu0 0
        %338 = vperm.xlu0 %337, %v334
        %v339 = vpop.permute.xlu0 %338
        %v341 = vlaneseq
        %v342 = vshrl.u32 %v341, 7
        %v343 = vsub.s32 0, %v342
        %v344 = vrot.slane %v335, %v343
        %v345 = vsub.f32 %v339, %v344
        %v346 = vand.u32 2147483647, %v345
        %347 = vset.pattern.permute.xlu0 1
        %348 = vperm.xlu0 %347, %v334
        %v349 = vpop.permute.xlu0 %348
        %v351 = vlaneseq
        %v352 = vshrl.u32 %v351, 7
        %v353 = vsub.s32 1, %v352
        %v354 = vrot.slane %v335, %v353
        %v355 = vsub.f32 %v349, %v354
        %v356 = vand.u32 2147483647, %v355
        %v357 = vadd.f32 %v346, %v356
        %358 = vset.pattern.permute.xlu0 2
        %359 = vperm.xlu0 %358, %v334
        %v360 = vpop.permute.xlu0 %359
        %v362 = vlaneseq
        %v363 = vshrl.u32 %v362, 7
        %v364 = vsub.s32 2, %v363
        %v365 = vrot.slane %v335, %v364
        %v366 = vsub.f32 %v360, %v365
        %v367 = vand.u32 2147483647, %v366
        %v368 = vadd.f32 %v357, %v367
        %369 = vset.pattern.permute.xlu0 3
        %370 = vperm.xlu0 %369, %v334
        %v371 = vpop.permute.xlu0 %370
        %v373 = vlaneseq
        %v374 = vshrl.u32 %v373, 7
        %v375 = vsub.s32 3, %v374
        %v376 = vrot.slane %v335, %v375
        %v377 = vsub.f32 %v371, %v376
        %v378 = vand.u32 2147483647, %v377
        %v379 = vadd.f32 %v368, %v378
        %v380 = vmul.f32 %v335, 0.5
        %v382 = vrot.slane %v380, 2
        %v384 = vsub.f32 %v335, %v382
        %v385 = vadd.f32 %v335, %v382
        %v386 = vmul.f32 %v334, 0.5
        %388 = vrot.lane.b32.xlu0 %v386, 126
        %v389 = vpop.permute.xlu0 %388
        %v391 = vsub.f32 %v334, %v389
        %v392 = vadd.f32 %v334, %v389
        %v393 = vsub.f32 %v385, %v384
        %v395 = vrot.slane %v393, 1
        %v397 = vmul.f32 %v393, %v395
        %v398 = vsub.f32 %v392, %v391
        %400 = vrot.lane.b32.xlu0 %v398, 127
        %v401 = vpop.permute.xlu0 %400
        %v403 = vmul.f32 %v398, %v401
        %v404 = vlaneseq
        %v405 = vshrl.u32 %v404, 7
        %v406 = vsub.s32 0, %v405
        %v407 = vrot.slane %v385, %v406
        %409 = vset.pattern.permute.xlu0 0
        %410 = vperm.xlu0 %409, %v392
        %v411 = vpop.permute.xlu0 %410
        %v413 = vmin.f32 %v407, %v411
        %v414 = vlaneseq
        %v415 = vshrl.u32 %v414, 7
        %v416 = vsub.s32 0, %v415
        %v417 = vrot.slane %v384, %v416
        %419 = vset.pattern.permute.xlu0 0
        %420 = vperm.xlu0 %419, %v391
        %v421 = vpop.permute.xlu0 %420
        %v423 = vmax.f32 %v417, %v421
        %v424 = vsub.f32 %v413, %v423
        %v425 = vmax.f32 %v424, 0.0
        %v426 = vlaneseq
        %v427 = vshrl.u32 %v426, 7
        %v428 = vsub.s32 1, %v427
        %v429 = vrot.slane %v385, %v428
        %430 = vset.pattern.permute.xlu0 1
        %431 = vperm.xlu0 %430, %v392
        %v432 = vpop.permute.xlu0 %431
        %v434 = vmin.f32 %v429, %v432
        %v435 = vlaneseq
        %v436 = vshrl.u32 %v435, 7
        %v437 = vsub.s32 1, %v436
        %v438 = vrot.slane %v384, %v437
        %439 = vset.pattern.permute.xlu0 1
        %440 = vperm.xlu0 %439, %v391
        %v441 = vpop.permute.xlu0 %440
        %v443 = vmax.f32 %v438, %v441
        %v444 = vsub.f32 %v434, %v443
        %v445 = vmax.f32 %v444, 0.0
        %v446 = vmul.f32 %v425, %v445
        %v447 = vlaneseq
        %v448 = vshrl.u32 %v447, 7
        %v449 = vsub.s32 0, %v448
        %v450 = vrot.slane %v397, %v449
        %452 = vset.pattern.permute.xlu0 0
        %453 = vperm.xlu0 %452, %v403
        %v454 = vpop.permute.xlu0 %453
        %v456 = vadd.f32 %v450, %v454
        %v457 = vsub.f32 %v456, %v446
        %v458 = vrcp.pop %v457
        %v459 = vmul.f32 %v446, %v458
        %v460 = vmax.f32 %v407, %v411
        %v461 = vmin.f32 %v417, %v421
        %v462 = vsub.f32 %v460, %v461
        %v463 = vmax.f32 %v462, 0.0
        %v464 = vmax.f32 %v429, %v432
        %v465 = vmin.f32 %v438, %v441
        %v466 = vsub.f32 %v464, %v465
        %v467 = vmax.f32 %v466, 0.0
        %v468 = vmul.f32 %v463, %v467
        %v469 = vmul.f32 %v459, %v468
        %v470 = vsub.f32 %v468, %v469
        %v471 = vrcp.pop %v468
        %v472 = vmul.f32 %v470, %v471
        %v473 = vsub.f32 %v459, %v472
        %v474 = vmul.f32 %v379, 5.0
        %v475 = vadd.f32 %v333, %v474
        %v476 = vsub.f32 0.0, %v473
        %v477 = vmul.f32 %v476, 2.0
        %v478 = vadd.f32 %v475, %v477
        %vm479 = vcmask 64512
        %480 = vst.msk [vmem:[%s227] sm:$0xff] %vm479, %v478
        %s481 = sand.u32 %s130, 1
        %s482 = scalar_lea.sflag [#allocation3], %s481
        %s483 = sand.u32 %s130, 1
        %s484 = smul.addr %s483, 8
        %s485 = scalar_lea.vmem [#allocation2], %s484
        // Predicated region
        $region37: #{tpu_custom_call.1} parent=35 // pred_check
          %p486 = pneg %p140
        $region38: #{tpu_custom_call.1} parent=35 // pred_check_branch
          %488 = sbr.rel (%p486) target = $region40
        $region39: #{tpu_custom_call.1} parent=35 // pred_region
          %s490 = ssub.s32 128, 128
          %491 = vsyncadd %s482, %s490
          %s492 = smul.addr %s18, 128
          %s493 = scalar_lea.hbm %s4, %s492
          %s495 = sshll.u32 %s485, 4
          %s496 = int_to_ptr.vmem [resolvable:$true] %s495
          %498 = dma.vmem_to_hbm [thread:$0]  %s496, 128, %s493, %s482
        $region40: #{tpu_custom_call.1} parent=35 // pred_fallthru
          _
      $region36: #{tpu_custom_call.1} parent=5 // pred_fallthru
        _
      %p499 = scmp.le.s32.totalorder 2, %s13
      // Predicated region
      $region41: #{tpu_custom_call.1} parent=5 // pred_check
        %p500 = pneg %p499
      $region42: #{tpu_custom_call.1} parent=5 // pred_check_branch
        %502 = sbr.rel (%p500) target = $region44
      $region43: #{tpu_custom_call.1} parent=5 // pred_region
        %s503 = ssub.s32 %s13, 2
        // Predicated region
        $region45: #{tpu_custom_call.1} parent=43 // pred_check
          %p504 = pneg %p146
        $region46: #{tpu_custom_call.1} parent=43 // pred_check_branch
          %506 = sbr.rel (%p504) target = $region48
        $region47: #{tpu_custom_call.1} parent=43 // pred_region
          %s507 = sand.u32 %s131, 1
          %s508 = scalar_lea.sflag [#allocation3], %s507
          %s509 = sand.u32 %s131, 1
          %s510 = smul.addr %s509, 8
          %s511 = scalar_lea.vmem [#allocation2], %s510
          %512 = dma.done %s508, 128
        $region48: #{tpu_custom_call.1} parent=43 // pred_fallthru
          _
      $region44: #{tpu_custom_call.1} parent=5 // pred_fallthru
        _
    $region6: #{tpu_custom_call.1} parent=1 // loop_footer
      %s17 = sadd.s32 1, %s13
    $region7: #{tpu_custom_call.1} parent=1 // loop_footer_branch
      %12 = sbr.rel target = $region3
    $region8: #{tpu_custom_call.1} parent=1 // loop_exit
      _
    %513 = vsyncpa [#allocation3], 1
    %s514 = scalar_lea.sflag [#allocation3], 1
    %515 = vsyncpa %s514, 1

</llo_original>
